<compile_context>
chip_gen: v6e
topology: v6e:2x2x1
jax: 0.10.0
libtpu: 0.0.40
codegen_flags: <defaults>
</compile_context>

<pallas_src>
import jax
import jax.numpy as jnp
from jax.experimental import pallas as pl
from jax.experimental.pallas import tpu as pltpu


def _round_up(x, m):
    return ((x + m - 1) // m) * m


def _sublane_tile(dtype):
    # Second-minor layout tile: 8 for f32, 16 for bf16, 32 for int8/fp8.
    return max(8, 32 // jnp.dtype(dtype).itemsize)


def _make_kernel(b_n, c_in, use_mxu):
    def kernel(x_ref, w_ref, o_ref):
        # x_ref: (B_n, C_in, THW), w_ref: (C_out, C_in), o_ref: (B_n, C_out, THW)
        if use_mxu:
            w = w_ref[...]
            for b in range(b_n):  # static, small unroll (b_n <= 8 on this path)
                o_ref[b] = jnp.dot(
                    w, x_ref[b], preferred_element_type=jnp.float32
                ).astype(o_ref.dtype)
        else:
            # VPU path: C_in broadcast FMAs per output vreg. Accumulate in f32
            # explicitly (matches the MXU path / Conv2d even for bf16 inputs);
            # the casts are free slack on a memory-bound kernel.
            xf = x_ref[...].astype(jnp.float32)
            wf = w_ref[...].astype(jnp.float32)
            acc = wf[None, :, 0:1] * xf[:, 0:1, :]
            for c in range(1, c_in):
                acc = acc + wf[None, :, c:c + 1] * xf[:, c:c + 1, :]
            o_ref[...] = acc.astype(o_ref.dtype)
    return kernel


def projector_block(x_nchw, weight_oc, *, max_thw=64 * 1024,
                    vmem_block_budget_bytes=16 * 1024 * 1024):
    """Bias-free 1x1 conv (ProjectorBlock.forward).

    x_nchw:    (N, C_in, H, W)
    weight_oc: (C_out, C_in)   (Conv2d weight with the 1x1 kernel squeezed)
    returns:   (N, C_out, H, W)
    """
    N, C_in, H, W = x_nchw.shape
    C_out = weight_oc.shape[0]
    HW = H * W

    itemsize = jnp.dtype(x_nchw.dtype).itemsize
    sub = _sublane_tile(x_nchw.dtype)
    rc_in = _round_up(C_in, sub)    # sublane-padded resident channel counts
    rc_out = _round_up(C_out, sub)

    # MXU vs VPU: the unrolled-FMA path costs ~2*C_in*C_out VALU ops per
    # 128-lane output strip; past a few hundred that flips the kernel from
    # HBM-bound to VALU-bound, so hand it to the MXU (free vex-slot filler).
    use_mxu = (C_in * C_out) > 256

    # ---- pixel tile: lane-dense, as large as the (layout-aware) budget allows.
    def block_bytes(bn, t):
        # Double-buffered input + output blocks, sublane/lane padded.
        return 2 * bn * (rc_in + rc_out) * _round_up(t, 128) * itemsize

    thw = min(max_thw, _round_up(HW, 128))
    while thw > 128 and block_bytes(1, thw) > vmem_block_budget_bytes:
        thw = _round_up(max(128, thw // 2), 128)
    if thw >= HW:
        # One tile covers the whole pixel axis: use the exact extent (block
        # dim == full array dim is always legal, no masked lanes needed).
        thw = HW
    n_hw = pl.cdiv(HW, thw)

    # ---- batch blocking when the whole image fits in one pixel tile.
    b_n = 1
    if n_hw == 1 and N > 1:
        b_n = max(1, vmem_block_budget_bytes // max(1, block_bytes(1, thw)))
        b_n = min(b_n, N)
        if use_mxu:
            b_n = min(b_n, 8)               # static unrolled dot loop in kernel
        # Keep >= 2 grid steps along a "parallel" axis (v7x has 2 TensorCores).
        b_n = min(b_n, max(1, N // 2))
    n_b = pl.cdiv(N, b_n)

    kernel = _make_kernel(b_n, C_in, use_mxu)

    # NCHW viewed as (N, C_in, H*W): free reshape, no transpose / extra HBM pass.
    x_flat = x_nchw.reshape(N, C_in, HW)

    # Explicit scoped-VMEM limit: covers v5e's 16 MiB default, stays within
    # v7x's 64 MiB physical VMEM.
    est = block_bytes(b_n, thw) + rc_out * _round_up(C_in, 128) * itemsize
    vmem_limit = int(min(max(32 * 1024 * 1024, 2 * est), 48 * 1024 * 1024))

    out_flat = pl.pallas_call(
        kernel,
        out_shape=jax.ShapeDtypeStruct((N, C_out, HW), x_nchw.dtype),
        grid_spec=pltpu.PrefetchScalarGridSpec(
            num_scalar_prefetch=0,
            grid=(n_b, n_hw),
            in_specs=[
                pl.BlockSpec((b_n, C_in, thw), lambda n, j: (n, 0, j)),
                pl.BlockSpec((C_out, C_in), lambda n, j: (0, 0)),
            ],
            out_specs=pl.BlockSpec((b_n, C_out, thw), lambda n, j: (n, 0, j)),
        ),
        compiler_params=pltpu.CompilerParams(
            dimension_semantics=("parallel", "parallel"),
            vmem_limit_bytes=vmem_limit,
        ),
    )(x_flat, weight_oc)

    return out_flat.reshape(N, C_out, H, W)


if __name__ == "__main__":
    key = jax.random.PRNGKey(0)

    def run_case(k, N, C_in, C_out, H, W):
        kx, kw = jax.random.split(k)
        x = jax.random.normal(kx, (N, C_in, H, W), dtype=jnp.float32)
        # Conv2d default init (kernel_size=1 -> fan_in = C_in).
        bound = 1.0 / (C_in ** 0.5)
        w = jax.random.uniform(kw, (C_out, C_in), dtype=jnp.float32,
                               minval=-bound, maxval=bound)
        out = jax.block_until_ready(projector_block(x, w))
        ref = jnp.einsum("oc,nchw->nohw", w, x)
        assert out.shape == ref.shape
        assert jnp.allclose(out, ref, atol=1e-5, rtol=1e-5)

    k0, k1, k2 = jax.random.split(key, 3)
    # Primary small shape consistent with the module's forward (VPU path).
    run_case(k0, N=2, C_in=4, C_out=8, H=16, W=16)
    # Ragged H*W (not a multiple of 128) + larger channels -> MXU path.
    run_case(k1, N=3, C_in=32, C_out=16, H=9, W=13)
    # Small images, larger batch -> batch-blocked VPU path.
    run_case(k2, N=8, C_in=4, C_out=8, H=8, W=8)

    print("KERNEL_OK")
</pallas_src>

<mosaic_0001>
module attributes {stable_mosaic.version = 11 : i64} {
  func.func @kernel(%arg0: i32, %arg1: i32, %arg2: memref<1x4x256xf32, #tpu.memory_space<vmem>>, %arg3: memref<8x4xf32, #tpu.memory_space<vmem>>, %arg4: memref<1x8x256xf32, #tpu.memory_space<vmem>>) attributes {dimension_semantics = [#tpu.dimension_semantics<parallel>, #tpu.dimension_semantics<parallel>], iteration_bounds = array<i64: 2, 1>, scalar_prefetch = 0 : i64, scratch_operands = 0 : i64, tpu.core_type = #tpu.core_type<tc>, window_params = [{transform_indices = @transform_0, window_bounds = array<i64: 1, 4, 256>}, {pipeline_mode = #tpu.pipeline_mode<synchronous>, transform_indices = @transform_1, window_bounds = array<i64: 8, 4>}, {transform_indices = @transform_2, window_bounds = array<i64: 1, 8, 256>}]} {
    %c0 = arith.constant 0 : index
    %c0_0 = arith.constant 0 : index
    %c0_1 = arith.constant 0 : index
    %0 = vector.load %arg2[%c0, %c0_0, %c0_1] : memref<1x4x256xf32, #tpu.memory_space<vmem>>, vector<1x4x256xf32>
    %c0_2 = arith.constant 0 : index
    %c0_3 = arith.constant 0 : index
    %1 = vector.load %arg3[%c0_2, %c0_3] : memref<8x4xf32, #tpu.memory_space<vmem>>, vector<8x4xf32>
    %2 = vector.extract_strided_slice %1 {offsets = [0, 0], sizes = [8, 1], strides = [1, 1]} : vector<8x4xf32> to vector<8x1xf32>
    %3 = vector.shape_cast %2 : vector<8x1xf32> to vector<1x8x1xf32>
    %4 = vector.extract_strided_slice %0 {offsets = [0, 0, 0], sizes = [1, 1, 256], strides = [1, 1, 1]} : vector<1x4x256xf32> to vector<1x1x256xf32>
    %5 = vector.broadcast %3 : vector<1x8x1xf32> to vector<1x8x256xf32>
    %6 = vector.broadcast %4 : vector<1x1x256xf32> to vector<1x8x256xf32>
    %7 = arith.mulf %5, %6 : vector<1x8x256xf32>
    %8 = vector.extract_strided_slice %1 {offsets = [0, 1], sizes = [8, 1], strides = [1, 1]} : vector<8x4xf32> to vector<8x1xf32>
    %9 = vector.shape_cast %8 : vector<8x1xf32> to vector<1x8x1xf32>
    %10 = vector.extract_strided_slice %0 {offsets = [0, 1, 0], sizes = [1, 1, 256], strides = [1, 1, 1]} : vector<1x4x256xf32> to vector<1x1x256xf32>
    %11 = vector.broadcast %9 : vector<1x8x1xf32> to vector<1x8x256xf32>
    %12 = vector.broadcast %10 : vector<1x1x256xf32> to vector<1x8x256xf32>
    %13 = arith.mulf %11, %12 : vector<1x8x256xf32>
    %14 = arith.addf %7, %13 : vector<1x8x256xf32>
    %15 = vector.extract_strided_slice %1 {offsets = [0, 2], sizes = [8, 1], strides = [1, 1]} : vector<8x4xf32> to vector<8x1xf32>
    %16 = vector.shape_cast %15 : vector<8x1xf32> to vector<1x8x1xf32>
    %17 = vector.extract_strided_slice %0 {offsets = [0, 2, 0], sizes = [1, 1, 256], strides = [1, 1, 1]} : vector<1x4x256xf32> to vector<1x1x256xf32>
    %18 = vector.broadcast %16 : vector<1x8x1xf32> to vector<1x8x256xf32>
    %19 = vector.broadcast %17 : vector<1x1x256xf32> to vector<1x8x256xf32>
    %20 = arith.mulf %18, %19 : vector<1x8x256xf32>
    %21 = arith.addf %14, %20 : vector<1x8x256xf32>
    %22 = vector.extract_strided_slice %1 {offsets = [0, 3], sizes = [8, 1], strides = [1, 1]} : vector<8x4xf32> to vector<8x1xf32>
    %23 = vector.shape_cast %22 : vector<8x1xf32> to vector<1x8x1xf32>
    %24 = vector.extract_strided_slice %0 {offsets = [0, 3, 0], sizes = [1, 1, 256], strides = [1, 1, 1]} : vector<1x4x256xf32> to vector<1x1x256xf32>
    %25 = vector.broadcast %23 : vector<1x8x1xf32> to vector<1x8x256xf32>
    %26 = vector.broadcast %24 : vector<1x1x256xf32> to vector<1x8x256xf32>
    %27 = arith.mulf %25, %26 : vector<1x8x256xf32>
    %28 = arith.addf %21, %27 : vector<1x8x256xf32>
    %c0_4 = arith.constant 0 : index
    %c0_5 = arith.constant 0 : index
    %c0_6 = arith.constant 0 : index
    %29 = vector.load %arg4[%c0_4, %c0_5, %c0_6] : memref<1x8x256xf32, #tpu.memory_space<vmem>>, vector<1x8x256xf32>
    tpu.vector_store %arg4[%c0_4, %c0_5, %c0_6], %28 {strides = array<i32>} : memref<1x8x256xf32, #tpu.memory_space<vmem>>, vector<1x8x256xf32>,
    return
  }
  func.func @transform_0(%arg0: i32, %arg1: i32) -> (i32, i32, i32) {
    %c0_i32 = arith.constant 0 : i32
    %c0_i32_0 = arith.constant 0 : i32
    return %arg0, %c0_i32, %arg1 : i32, i32, i32
  }
  func.func @transform_1(%arg0: i32, %arg1: i32) -> (i32, i32) {
    %c0_i32 = arith.constant 0 : i32
    %c0_i32_0 = arith.constant 0 : i32
    %c0_i32_1 = arith.constant 0 : i32
    return %c0_i32, %c0_i32_0 : i32, i32
  }
  func.func @transform_2(%arg0: i32, %arg1: i32) -> (i32, i32, i32) {
    %c0_i32 = arith.constant 0 : i32
    %c0_i32_0 = arith.constant 0 : i32
    return %arg0, %c0_i32, %arg1 : i32, i32, i32
  }
}

</mosaic_0001>

<llo_original>
// kernel: tpu_custom_call.1
$region0: #{tpu_custom_call.1}
  #allocation0 [shape = 'u32[]', space=smem, size = 0x4, offset = 0x4, fixed_abs, tag = 'smem constant byte address 0x4 - core index']
  #allocation1 [shape = 'u32[144,128]{1,0:T(1,128)}', space=vmem, size = 0x12000, scoped, tag = 'internal scratch']
  %s0 = inlined_call_operand.hbm [shape: f32[2,4,256], index: 0, kind: input, shape index: {}]
  %s1 = inlined_call_operand.vmem [shape: f32[8,4], index: 1, kind: input, shape index: {}]
  %s2 = inlined_call_operand.hbm [shape: f32[2,8,256], index: 2, kind: output, shape index: {}]
  %s3 = sld [smem:[#allocation0]]
  $region45: #{tpu_custom_call.1} parent=0
    _
  %s5 = ssub.s32 1, %s3
  %s6 = scalar_select 0, %s5, %s3
  $region1: #{tpu_custom_call.1} parent=0
    #allocation2 [shape = 'u8[8192]{0}', space=vmem, size = 0x2000, scoped, tag = 'input window, operand 0']
    #allocation3 [shape = 's32[2]{0}', space=sflag, size = 0x8, scoped, tag = 'scoped memory for tpu_custom_call.1']
    #allocation4 [shape = 's32[2]{0}', space=sflag, size = 0x8, scoped, tag = 'scoped memory for tpu_custom_call.1']
    #allocation5 [shape = 'u8[16384]{0}', space=vmem, size = 0x4000, scoped, tag = 'output window, operand 0']
    %7 = vsyncpa [#allocation3], 0
    %s8 = scalar_lea.sflag [#allocation3], 1
    %9 = vsyncpa %s8, 0
    %10 = vsyncpa [#allocation4], 0
    %s11 = scalar_lea.sflag [#allocation4], 1
    %12 = vsyncpa %s11, 0
    loop: start=0, step=1, limit=4
    $region2: #{tpu_custom_call.1} parent=1 // loop_pre_header
      _
    $region3: #{tpu_custom_call.1} parent=1 // loop_header
      %s14 = sphi 0, %s18
      %p15 = scmp.ge.s32.totalorder %s14, 4
      %s21 = sphi 0, %s33
      %s22 = sphi 0, %s29
      %s23 = sphi 0, %s21
      %s24 = sphi 0, %s22
      %s25 = sphi 0, %s23
      %s26 = sphi 0, %s24
      %s38 = sphi 0, %s40
      %s41 = sphi 0, %s38
      %s42 = sphi 0, %s41
      %s58 = sphi 0, %s42
      %s62 = sphi 0, %s62
      %s64 = sphi 0, %s62
      %s65 = sphi 0, %s64
      %s79 = sphi 0, %s65
      %s87 = sphi 0, %s89
      %s90 = sphi 0, %s87
      %s91 = sphi 0, %s90
      %s107 = sphi 0, %s91
    $region4: #{tpu_custom_call.1} parent=1 // loop_header_branch
      %17 = sbr.rel (%p15) target = $region8
    $region5: #{tpu_custom_call.1} parent=1 // loop_body
      %s19 = ssub.s32 %s14, 1
      %s20 = ssub.s32 %s14, 2
      %s27 = sadd.s32 1, %s22
      %p28 = scmp.ge.s32.totalorder %s27, 1
      %s29 = scalar_select %p28, 0, %s27
      %s30 = sadd.s32 1, %s21
      %s31 = scalar_select %p28, %s30, %s21
      %p32 = scmp.ge.s32.totalorder %s31, 2
      %s33 = scalar_select %p32, 0, %s31
      %s34 = ssub.s32 %s21, %s33
      %s35 = ssub.s32 %s22, %s29
      %s36 = sor.u32 %s34, %s35
      %p37 = scmp.eq.s32.totalorder %s36, 0
      %s39 = sadd.s32 %s38, 1
      %s40 = scalar_select %p37, %s38, %s39
      %p43 = pneg %p37
      %p44 = scmp.eq.s32.totalorder %s14, 1
      %p45 = por %p43, %p44
      %p46 = scmp.ne.s32.totalorder %s38, %s41
      %p47 = scmp.eq.s32.totalorder %s14, 0
      %p48 = por %p46, %p47
      %p49 = scmp.ne.s32.totalorder %s38, %s41
      %p50 = scmp.eq.s32.totalorder %s19, 1
      %p51 = por %p49, %p50
      %p52 = scmp.ne.s32.totalorder %s41, %s42
      %p53 = scmp.eq.s32.totalorder %s19, 0
      %p54 = por %p52, %p53
      %p55 = scmp.ne.s32.totalorder %s41, %s42
      %p56 = scmp.eq.s32.totalorder %s20, 1
      %p57 = por %p55, %p56
      %p59 = scmp.ne.s32.totalorder %s42, %s58
      %p60 = scmp.eq.s32.totalorder %s20, 0
      %p61 = por %p59, %p60
      %s63 = sadd.s32 %s62, 1
      %p66 = scmp.eq.s32.totalorder %s14, 1
      %p67 = scmp.ne.s32.totalorder %s62, %s64
      %p68 = scmp.eq.s32.totalorder %s14, 0
      %p69 = por %p67, %p68
      %p70 = scmp.ne.s32.totalorder %s62, %s64
      %p71 = scmp.eq.s32.totalorder %s19, 1
      %p72 = por %p70, %p71
      %p73 = scmp.ne.s32.totalorder %s64, %s65
      %p74 = scmp.eq.s32.totalorder %s19, 0
      %p75 = por %p73, %p74
      %p76 = scmp.ne.s32.totalorder %s64, %s65
      %p77 = scmp.eq.s32.totalorder %s20, 1
      %p78 = por %p76, %p77
      %p80 = scmp.ne.s32.totalorder %s65, %s79
      %p81 = scmp.eq.s32.totalorder %s20, 0
      %p82 = por %p80, %p81
      %s83 = ssub.s32 %s21, %s33
      %s84 = ssub.s32 %s22, %s29
      %s85 = sor.u32 %s83, %s84
      %p86 = scmp.eq.s32.totalorder %s85, 0
      %s88 = sadd.s32 %s87, 1
      %s89 = scalar_select %p86, %s87, %s88
      %p92 = pneg %p86
      %p93 = scmp.eq.s32.totalorder %s14, 1
      %p94 = por %p92, %p93
      %p95 = scmp.ne.s32.totalorder %s87, %s90
      %p96 = scmp.eq.s32.totalorder %s14, 0
      %p97 = por %p95, %p96
      %p98 = scmp.ne.s32.totalorder %s87, %s90
      %p99 = scmp.eq.s32.totalorder %s19, 1
      %p100 = por %p98, %p99
      %p101 = scmp.ne.s32.totalorder %s90, %s91
      %p102 = scmp.eq.s32.totalorder %s19, 0
      %p103 = por %p101, %p102
      %p104 = scmp.ne.s32.totalorder %s90, %s91
      %p105 = scmp.eq.s32.totalorder %s20, 1
      %p106 = por %p104, %p105
      %p108 = scmp.ne.s32.totalorder %s91, %s107
      %p109 = scmp.eq.s32.totalorder %s20, 0
      %p110 = por %p108, %p109
      %p111 = scmp.le.s32.totalorder 1, %s14
      %p112 = scmp.lt.s32.totalorder %s14, 3
      %p113 = pnand %p111, %p112
      %p114 = pneg %p113
      // Predicated region
      $region9: #{tpu_custom_call.1} parent=5 // pred_check
        _
      $region10: #{tpu_custom_call.1} parent=5 // pred_check_branch
        %116 = sbr.rel (%p113) target = $region12
      $region11: #{tpu_custom_call.1} parent=5 // pred_region
        %s117 = ssub.s32 %s14, 1
        // Predicated region
        $region13: #{tpu_custom_call.1} parent=11 // pred_check
          %p118 = pneg %p75
        $region14: #{tpu_custom_call.1} parent=11 // pred_check_branch
          %120 = sbr.rel (%p118) target = $region16
        $region15: #{tpu_custom_call.1} parent=11 // pred_region
          _
        $region16: #{tpu_custom_call.1} parent=11 // pred_fallthru
          _
      $region12: #{tpu_custom_call.1} parent=5 // pred_fallthru
        _
      %p121 = scmp.lt.s32.totalorder %s14, 2
      // Predicated region
      $region17: #{tpu_custom_call.1} parent=5 // pred_check
        %p122 = pneg %p121
      $region18: #{tpu_custom_call.1} parent=5 // pred_check_branch
        %124 = sbr.rel (%p122) target = $region20
      $region19: #{tpu_custom_call.1} parent=5 // pred_region
        // Predicated region
        $region21: #{tpu_custom_call.1} parent=19 // pred_check
          %p125 = pneg %p48
        $region22: #{tpu_custom_call.1} parent=19 // pred_check_branch
          %127 = sbr.rel (%p125) target = $region24
        $region23: #{tpu_custom_call.1} parent=19 // pred_region
          %s128 = sand.u32 %s38, 1
          %s129 = scalar_lea.sflag [#allocation3], %s128
          %s130 = sand.u32 %s38, 1
          %s131 = smul.addr %s130, 8
          %s132 = scalar_lea.vmem [#allocation2], %s131
          %s133 = smul.u32 2, %s22
          %s135 = ssub.s32 128, 128
          %136 = vsyncadd %s129, %s135
          %s137 = smul.addr %s21, 2
          %s138 = sadd.s32 %s133, %s137
          %s139 = smul.addr %s138, 64
          %s140 = scalar_lea.hbm %s0, %s139
          %s142 = sshll.u32 %s132, 4
          %s143 = int_to_ptr.vmem [resolvable:$true] %s142
          %145 = dma.hbm_to_vmem [thread:$0]  %s140, 128, %s143, %s129
        $region24: #{tpu_custom_call.1} parent=19 // pred_fallthru
          _
      $region20: #{tpu_custom_call.1} parent=5 // pred_fallthru
        _
      %p146 = scmp.le.s32.totalorder 1, %s14
      %p147 = scmp.lt.s32.totalorder %s14, 3
      %p148 = pnand %p146, %p147
      %p149 = pneg %p148
      // Predicated region
      $region25: #{tpu_custom_call.1} parent=5 // pred_check
        _
      $region26: #{tpu_custom_call.1} parent=5 // pred_check_branch
        %151 = sbr.rel (%p148) target = $region28
      $region27: #{tpu_custom_call.1} parent=5 // pred_region
        %s152 = ssub.s32 %s14, 1
        %s153 = sand.u32 %s41, 1
        %s154 = scalar_lea.sflag [#allocation3], %s153
        %s155 = sand.u32 %s41, 1
        %s156 = smul.addr %s155, 8
        %s157 = scalar_lea.vmem [#allocation2], %s156
        // Predicated region
        $region29: #{tpu_custom_call.1} parent=27 // pred_check
          %p158 = pneg %p54
        $region30: #{tpu_custom_call.1} parent=27 // pred_check_branch
          %160 = sbr.rel (%p158) target = $region32
        $region31: #{tpu_custom_call.1} parent=27 // pred_region
          %161 = dma.done %s154, 128
        $region32: #{tpu_custom_call.1} parent=27 // pred_fallthru
          _
        %s162 = sand.u32 %s41, 1
        %s163 = scalar_lea.sflag [#allocation3], %s162
        %s164 = sand.u32 %s41, 1
        %s165 = smul.addr %s164, 8
        %s166 = scalar_lea.vmem [#allocation2], %s165
        %p167 = pneg %p54
        %p168 = pneg %p51
        %p169 = pneg %p75
        %p170 = pneg %p72
        %p171 = pneg %p103
        %p172 = pneg %p100
        %s173 = sand.u32 %s90, 1
        %s174 = scalar_lea.sflag [#allocation4], %s173
        %s175 = sand.u32 %s90, 1
        %s176 = smul.addr %s175, 16
        %s177 = scalar_lea.vmem [#allocation5], %s176
        %s178 = smul.u32 2, %s24
        %s179 = smul.u32 2, %s24
        %v180 = vld [vmem:[%s157] sm:$0xff]
        %v181 = vld [vmem:[%s1] sm:$0xff]
        %183 = vset.pattern.permute.xlu0 0
        %184 = vperm.xlu0 %183, %v181
        %v185 = vpop.permute.xlu0 %184
        %v188 = vlaneseq
        %v189 = vshrl.u32 %v188, 7
        %v190 = vsub.s32 0, %v189
        %v191 = vrot.slane %v180, %v190
        %v192 = vlaneseq
        %v193 = vshrl.u32 %v192, 7
        %v194 = vsub.s32 4, %v193
        %v195 = vrot.slane %v180, %v194
        %v198 = vlaneseq
        %v199 = vshrl.u32 %v198, 7
        %v200 = vsub.s32 0, %v199
        %v201 = vrot.slane %v191, %v200
        %v202 = vlaneseq
        %v203 = vshrl.u32 %v202, 7
        %v204 = vsub.s32 0, %v203
        %v205 = vrot.slane %v195, %v204
        %v206 = vmul.f32 %v185, %v201
        %v207 = vmul.f32 %v185, %v205
        %208 = vset.pattern.permute.xlu0 1
        %209 = vperm.xlu0 %208, %v181
        %v210 = vpop.permute.xlu0 %209
        %v212 = vlaneseq
        %v213 = vshrl.u32 %v212, 7
        %v214 = vsub.s32 1, %v213
        %v215 = vrot.slane %v180, %v214
        %v216 = vlaneseq
        %v217 = vshrl.u32 %v216, 7
        %v218 = vsub.s32 5, %v217
        %v219 = vrot.slane %v180, %v218
        %v222 = vlaneseq
        %v223 = vshrl.u32 %v222, 7
        %v224 = vsub.s32 1, %v223
        %v225 = vrot.slane %v215, %v224
        %v226 = vlaneseq
        %v227 = vshrl.u32 %v226, 7
        %v228 = vsub.s32 1, %v227
        %v229 = vrot.slane %v219, %v228
        %v230 = vmul.f32 %v210, %v225
        %v231 = vmul.f32 %v210, %v229
        %v232 = vadd.f32 %v206, %v230
        %v233 = vadd.f32 %v207, %v231
        %234 = vset.pattern.permute.xlu0 2
        %235 = vperm.xlu0 %234, %v181
        %v236 = vpop.permute.xlu0 %235
        %v238 = vlaneseq
        %v239 = vshrl.u32 %v238, 7
        %v240 = vsub.s32 2, %v239
        %v241 = vrot.slane %v180, %v240
        %v242 = vlaneseq
        %v243 = vshrl.u32 %v242, 7
        %v244 = vsub.s32 6, %v243
        %v245 = vrot.slane %v180, %v244
        %v248 = vlaneseq
        %v249 = vshrl.u32 %v248, 7
        %v250 = vsub.s32 2, %v249
        %v251 = vrot.slane %v241, %v250
        %v252 = vlaneseq
        %v253 = vshrl.u32 %v252, 7
        %v254 = vsub.s32 2, %v253
        %v255 = vrot.slane %v245, %v254
        %v256 = vmul.f32 %v236, %v251
        %v257 = vmul.f32 %v236, %v255
        %v258 = vadd.f32 %v232, %v256
        %v259 = vadd.f32 %v233, %v257
        %260 = vset.pattern.permute.xlu0 3
        %261 = vperm.xlu0 %260, %v181
        %v262 = vpop.permute.xlu0 %261
        %v264 = vlaneseq
        %v265 = vshrl.u32 %v264, 7
        %v266 = vsub.s32 3, %v265
        %v267 = vrot.slane %v180, %v266
        %v268 = vlaneseq
        %v269 = vshrl.u32 %v268, 7
        %v270 = vsub.s32 7, %v269
        %v271 = vrot.slane %v180, %v270
        %v274 = vlaneseq
        %v275 = vshrl.u32 %v274, 7
        %v276 = vsub.s32 3, %v275
        %v277 = vrot.slane %v267, %v276
        %v278 = vlaneseq
        %v279 = vshrl.u32 %v278, 7
        %v280 = vsub.s32 3, %v279
        %v281 = vrot.slane %v271, %v280
        %v282 = vmul.f32 %v262, %v277
        %v283 = vmul.f32 %v262, %v281
        %v284 = vadd.f32 %v258, %v282
        %v285 = vadd.f32 %v259, %v283
        %286 = vst [vmem:[%s177] sm:$0xff] %v284
        %287 = vst [vmem:[%s177 + $0x8] sm:$0xff] %v285
        %s288 = sand.u32 %s90, 1
        %s289 = scalar_lea.sflag [#allocation4], %s288
        %s290 = sand.u32 %s90, 1
        %s291 = smul.addr %s290, 16
        %s292 = scalar_lea.vmem [#allocation5], %s291
        // Predicated region
        $region33: #{tpu_custom_call.1} parent=27 // pred_check
          %p293 = pneg %p100
        $region34: #{tpu_custom_call.1} parent=27 // pred_check_branch
          %295 = sbr.rel (%p293) target = $region36
        $region35: #{tpu_custom_call.1} parent=27 // pred_region
          %s296 = smul.u32 2, %s24
          %s298 = ssub.s32 256, 256
          %299 = vsyncadd %s289, %s298
          %s300 = smul.addr %s23, 2
          %s301 = sadd.s32 %s296, %s300
          %s302 = smul.addr %s301, 128
          %s303 = scalar_lea.hbm %s2, %s302
          %s305 = sshll.u32 %s292, 4
          %s306 = int_to_ptr.vmem [resolvable:$true] %s305
          %308 = dma.vmem_to_hbm [thread:$0]  %s306, 256, %s303, %s289
        $region36: #{tpu_custom_call.1} parent=27 // pred_fallthru
          _
      $region28: #{tpu_custom_call.1} parent=5 // pred_fallthru
        _
      %p309 = scmp.le.s32.totalorder 2, %s14
      // Predicated region
      $region37: #{tpu_custom_call.1} parent=5 // pred_check
        %p310 = pneg %p309
      $region38: #{tpu_custom_call.1} parent=5 // pred_check_branch
        %312 = sbr.rel (%p310) target = $region40
      $region39: #{tpu_custom_call.1} parent=5 // pred_region
        %s313 = ssub.s32 %s14, 2
        // Predicated region
        $region41: #{tpu_custom_call.1} parent=39 // pred_check
          %p314 = pneg %p106
        $region42: #{tpu_custom_call.1} parent=39 // pred_check_branch
          %316 = sbr.rel (%p314) target = $region44
        $region43: #{tpu_custom_call.1} parent=39 // pred_region
          %s317 = sand.u32 %s91, 1
          %s318 = scalar_lea.sflag [#allocation4], %s317
          %s319 = sand.u32 %s91, 1
          %s320 = smul.addr %s319, 16
          %s321 = scalar_lea.vmem [#allocation5], %s320
          %322 = dma.done %s318, 256
        $region44: #{tpu_custom_call.1} parent=39 // pred_fallthru
          _
      $region40: #{tpu_custom_call.1} parent=5 // pred_fallthru
        _
    $region6: #{tpu_custom_call.1} parent=1 // loop_footer
      %s18 = sadd.s32 1, %s14
    $region7: #{tpu_custom_call.1} parent=1 // loop_footer_branch
      %13 = sbr.rel target = $region3
    $region8: #{tpu_custom_call.1} parent=1 // loop_exit
      _
    %323 = vsyncpa [#allocation3], 1
    %s324 = scalar_lea.sflag [#allocation3], 1
    %325 = vsyncpa %s324, 1
    %326 = vsyncpa [#allocation4], 1
    %s327 = scalar_lea.sflag [#allocation4], 1
    %328 = vsyncpa %s327, 1

</llo_original>
